<compile_context>
chip_gen: v6e
topology: v6e:2x2x1
jax: 0.10.0
libtpu: 0.0.40
codegen_flags: <defaults>
</compile_context>

<pallas_src>
import jax
import jax.numpy as jnp
from jax.experimental import pallas as pl
from jax.experimental.pallas import tpu as pltpu

HIDDEN = 60
LANES = 128  # every layer's output dim is zero-padded to a full lane width


def _round_up(x, m):
    return (x + m - 1) // m * m


def _net_kernel(x_ref, w1_ref, w_ref, b_ref, o_ref):
    """Fused 4-layer MLP on one (TB, F) batch tile.

    x_ref : (TB, F)        f32    streamed batch tile (cast to bf16 in-kernel)
    w1_ref: (F, 128)       bf16   cols >= 60 are zero
    w_ref : (3, 128, 128)  bf16   w2, w3, w4 zero-padded (zero rows & cols)
    b_ref : (4, 128)       f32    b1..b4 zero-padded
    o_ref : (TB, 128)      bf16   cols >= n_classes are zero / dropped by caller
    """
    compute = w1_ref.dtype

    # clayer_1 + relu (MXU in bf16, f32 accumulate, f32 epilogue -> v5e-safe)
    h = jnp.dot(x_ref[...].astype(compute), w1_ref[...],
                preferred_element_type=jnp.float32)
    h = jnp.maximum(h + b_ref[0:1, :], 0.0)

    # clayer_2 + relu
    h = jnp.dot(h.astype(compute), w_ref[0], preferred_element_type=jnp.float32)
    h = jnp.maximum(h + b_ref[1:2, :], 0.0)

    # clayer_3 + relu
    h = jnp.dot(h.astype(compute), w_ref[1], preferred_element_type=jnp.float32)
    h = jnp.maximum(h + b_ref[2:3, :], 0.0)

    # fc (no activation) -- lane-dense (TB, 128) unmasked bf16 store
    h = jnp.dot(h.astype(compute), w_ref[2], preferred_element_type=jnp.float32)
    o_ref[...] = (h + b_ref[3:4, :]).astype(o_ref.dtype)


def _pack_params(params, compute_dtype=jnp.bfloat16):
    """Zero-pad every output dim to 128 lanes and pack into 3 operands."""
    w1, w2, w3, w4 = params["w1"], params["w2"], params["w3"], params["w4"]
    b1, b2, b3, b4 = params["b1"], params["b2"], params["b3"], params["b4"]
    F = w1.shape[0]

    def pad_w_sq(w):  # -> (128, 128), zero rows/cols outside the real block
        out = jnp.zeros((LANES, LANES), w.dtype)
        return out.at[: w.shape[0], : w.shape[1]].set(w)

    def pad_b(b):  # -> (128,)
        out = jnp.zeros((LANES,), b.dtype)
        return out.at[: b.shape[-1]].set(b.reshape(-1))

    w1_p = jnp.zeros((F, LANES), w1.dtype).at[:, : w1.shape[1]].set(w1)
    w_slab = jnp.stack([pad_w_sq(w2), pad_w_sq(w3), pad_w_sq(w4)], axis=0)
    b_slab = jnp.stack([pad_b(b1), pad_b(b2), pad_b(b3), pad_b(b4)], axis=0)

    return (w1_p.astype(compute_dtype),
            w_slab.astype(compute_dtype),
            b_slab.astype(jnp.float32))


def net_forward(x, params, *, tb=4096, compute_dtype=jnp.bfloat16,
                store_dtype=jnp.bfloat16):
    """x: (B, F) float32, params: dict of (in,out) weights and (1,out) biases."""
    B, F = x.shape
    n_classes = params["w4"].shape[1]
    x = x.astype(jnp.float32)

    w1_p, w_slab, b_slab = _pack_params(params, compute_dtype)

    store_bytes = jnp.dtype(store_dtype).itemsize

    # --- batch-tile selection -------------------------------------------------
    # VMEM cap: double-buffered f32 x tile + store-dtype out tile per step,
    # kept well under v7x's 32 MiB scoped default even for wide F.
    bytes_per_row = F * 4 + LANES * store_bytes
    vmem_budget = 24 * 1024 * 1024
    tb_vmem_cap = max(16, (vmem_budget // (2 * bytes_per_row)) // 16 * 16)
    # Split cap: guarantee >=2 grid steps whenever B allows it, so the
    # "parallel" batch axis shards across both TensorCores on v7x.
    tb_split_cap = _round_up(-(-B // 2), 16)

    TB = max(16, min(_round_up(tb, 16), tb_vmem_cap, tb_split_cap))
    Bp = _round_up(B, TB)

    # Only materialize a padded copy of x when the batch isn't a tile multiple.
    x_in = x if Bp == B else jnp.zeros((Bp, F), x.dtype).at[:B, :].set(x)

    cost = pl.CostEstimate(
        flops=2 * Bp * (F * LANES + 3 * LANES * LANES),
        transcendentals=0,
        bytes_accessed=(Bp * F * 4                      # x in (f32)
                        + Bp * LANES * store_bytes      # out
                        + F * LANES * 2                 # w1
                        + 3 * LANES * LANES * 2         # w2..w4
                        + 4 * LANES * 4),               # biases
    )

    out = pl.pallas_call(
        _net_kernel,
        out_shape=jax.ShapeDtypeStruct((Bp, LANES), store_dtype),
        grid=(Bp // TB,),
        in_specs=[
            pl.BlockSpec((TB, F), lambda i: (i, 0)),               # streamed x
            pl.BlockSpec((F, LANES), lambda i: (0, 0)),            # resident w1
            pl.BlockSpec((3, LANES, LANES), lambda i: (0, 0, 0)),  # resident w2..w4
            pl.BlockSpec((4, LANES), lambda i: (0, 0)),            # resident biases
        ],
        out_specs=pl.BlockSpec((TB, LANES), lambda i: (i, 0)),
        compiler_params=pltpu.CompilerParams(
            dimension_semantics=("parallel",),   # megacore sharding on v7x
        ),
        cost_estimate=cost,
    )(x_in, w1_p, w_slab, b_slab)

    # Slice off padded rows/lanes, then cast back to f32 for the caller.
    return out[:B, :n_classes].astype(jnp.float32)


def init_params(key, in_features, n_classes):
    """Deterministic init matching the PyTorch module's parameter shapes.

    PyTorch nn.Linear stores weight as (out, in); we store the transpose
    (in, out) so the kernel computes x @ W + b with identical math.
    Uses U(-1/sqrt(fan_in), 1/sqrt(fan_in)) like torch's default init.
    """
    dims = [(in_features, HIDDEN), (HIDDEN, HIDDEN),
            (HIDDEN, n_classes), (n_classes, n_classes)]
    params = {}
    keys = jax.random.split(key, 2 * len(dims))
    for i, (fan_in, fan_out) in enumerate(dims):
        bound = 1.0 / (fan_in ** 0.5)
        params[f"w{i+1}"] = jax.random.uniform(
            keys[2 * i], (fan_in, fan_out), jnp.float32, -bound, bound)
        params[f"b{i+1}"] = jax.random.uniform(
            keys[2 * i + 1], (1, fan_out), jnp.float32, -bound, bound)
    return params


def net_forward_ref_f32(x, params):
    """Pure-JAX f32 reference (exact PyTorch-module semantics)."""
    h = jnp.maximum(x @ params["w1"] + params["b1"], 0.0)
    h = jnp.maximum(h @ params["w2"] + params["b2"], 0.0)
    h = jnp.maximum(h @ params["w3"] + params["b3"], 0.0)
    return h @ params["w4"] + params["b4"]


def net_forward_ref_bf16(x, params):
    """Pure-JAX reference with the same bf16-in / f32-accumulate casts as the kernel."""
    c = jnp.bfloat16

    def lin(h, w, b):
        return jnp.dot(h.astype(c), w.astype(c),
                       preferred_element_type=jnp.float32) + b

    h = jnp.maximum(lin(x, params["w1"], params["b1"]), 0.0)
    h = jnp.maximum(lin(h, params["w2"], params["b2"]), 0.0)
    h = jnp.maximum(lin(h, params["w3"], params["b3"]), 0.0)
    return lin(h, params["w4"], params["b4"])


if __name__ == "__main__":
    key = jax.random.PRNGKey(0)
    k_x, k_p = jax.random.split(key)

    batch = 8
    in_features = 32   # input_shape[1]
    n_classes = 4

    x = jax.random.normal(k_x, (batch, in_features), jnp.float32)
    params = init_params(k_p, in_features, n_classes)

    out = net_forward(x, params)
    out = jax.block_until_ready(out)
    assert out.shape == (batch, n_classes)

    # Check against a reference using identical bf16->f32 MXU casts; the only
    # extra error in the kernel path is the final bf16 output store (~0.4% rel).
    ref_bf16 = net_forward_ref_bf16(x, params)
    assert jnp.allclose(out, ref_bf16, atol=2e-2, rtol=2e-2), "mismatch vs bf16 ref"

    # Loose check against the exact f32 PyTorch-semantics reference
    # (bf16 MXU inputs + bf16 store introduce sub-percent relative error).
    ref_f32 = net_forward_ref_f32(x, params)
    assert jnp.allclose(out, ref_f32, atol=5e-2, rtol=5e-2), "mismatch vs f32 ref"

    print("KERNEL_OK")
</pallas_src>

<mosaic_0001>
module attributes {stable_mosaic.version = 11 : i64} {
  func.func @_net_kernel(%arg0: i32, %arg1: memref<16x32xf32, #tpu.memory_space<vmem>>, %arg2: memref<32x128xbf16, #tpu.memory_space<vmem>>, %arg3: memref<3x128x128xbf16, #tpu.memory_space<vmem>>, %arg4: memref<4x128xf32, #tpu.memory_space<vmem>>, %arg5: memref<16x128xbf16, #tpu.memory_space<vmem>>) attributes {dimension_semantics = [#tpu.dimension_semantics<parallel>], iteration_bounds = array<i64: 1>, scalar_prefetch = 0 : i64, scratch_operands = 0 : i64, tpu.core_type = #tpu.core_type<tc>, window_params = [{transform_indices = @transform_0, window_bounds = array<i64: 16, 32>}, {pipeline_mode = #tpu.pipeline_mode<synchronous>, transform_indices = @transform_1, window_bounds = array<i64: 32, 128>}, {pipeline_mode = #tpu.pipeline_mode<synchronous>, transform_indices = @transform_2, window_bounds = array<i64: 3, 128, 128>}, {pipeline_mode = #tpu.pipeline_mode<synchronous>, transform_indices = @transform_3, window_bounds = array<i64: 4, 128>}, {transform_indices = @transform_4, window_bounds = array<i64: 16, 128>}]} {
    %c0 = arith.constant 0 : index
    %c0_0 = arith.constant 0 : index
    %0 = vector.load %arg1[%c0, %c0_0] : memref<16x32xf32, #tpu.memory_space<vmem>>, vector<16x32xf32>
    %1 = arith.truncf %0 : vector<16x32xf32> to vector<16x32xbf16>
    %c0_1 = arith.constant 0 : index
    %c0_2 = arith.constant 0 : index
    %2 = vector.load %arg2[%c0_1, %c0_2] : memref<32x128xbf16, #tpu.memory_space<vmem>>, vector<32x128xbf16>
    %cst = arith.constant dense<0.000000e+00> : vector<16x128xf32>
    %3 = tpu.matmul %1, %2, %cst {dimension_numbers = #tpu.dot_dimension_numbers<[1], [0], [0], [1], [0, 0, 1, 1], [], []>} : vector<16x32xbf16>, vector<32x128xbf16>, vector<16x128xf32> -> vector<16x128xf32>
    %c0_3 = arith.constant 0 : index
    %c0_4 = arith.constant 0 : index
    %4 = vector.load %arg4[%c0_3, %c0_4] : memref<4x128xf32, #tpu.memory_space<vmem>>, vector<1x128xf32>
    %5 = vector.broadcast %4 : vector<1x128xf32> to vector<16x128xf32>
    %6 = arith.addf %3, %5 : vector<16x128xf32>
    %cst_5 = arith.constant 0.000000e+00 : f32
    %7 = vector.broadcast %cst_5 : f32 to vector<16x128xf32>
    %8 = arith.maximumf %6, %7 : vector<16x128xf32>
    %9 = arith.truncf %8 : vector<16x128xf32> to vector<16x128xbf16>
    %c0_6 = arith.constant 0 : index
    %c0_7 = arith.constant 0 : index
    %c0_8 = arith.constant 0 : index
    %10 = vector.load %arg3[%c0_6, %c0_7, %c0_8] : memref<3x128x128xbf16, #tpu.memory_space<vmem>>, vector<1x128x128xbf16>
    %11 = vector.shape_cast %10 : vector<1x128x128xbf16> to vector<128x128xbf16>
    %cst_9 = arith.constant dense<0.000000e+00> : vector<16x128xf32>
    %12 = tpu.matmul %9, %11, %cst_9 {dimension_numbers = #tpu.dot_dimension_numbers<[1], [0], [0], [1], [0, 0, 1, 1], [], []>} : vector<16x128xbf16>, vector<128x128xbf16>, vector<16x128xf32> -> vector<16x128xf32>
    %c1 = arith.constant 1 : index
    %c0_10 = arith.constant 0 : index
    %13 = vector.load %arg4[%c1, %c0_10] : memref<4x128xf32, #tpu.memory_space<vmem>>, vector<1x128xf32>
    %14 = vector.broadcast %13 : vector<1x128xf32> to vector<16x128xf32>
    %15 = arith.addf %12, %14 : vector<16x128xf32>
    %cst_11 = arith.constant 0.000000e+00 : f32
    %16 = vector.broadcast %cst_11 : f32 to vector<16x128xf32>
    %17 = arith.maximumf %15, %16 : vector<16x128xf32>
    %18 = arith.truncf %17 : vector<16x128xf32> to vector<16x128xbf16>
    %c1_12 = arith.constant 1 : index
    %c0_13 = arith.constant 0 : index
    %c0_14 = arith.constant 0 : index
    %19 = vector.load %arg3[%c1_12, %c0_13, %c0_14] : memref<3x128x128xbf16, #tpu.memory_space<vmem>>, vector<1x128x128xbf16>
    %20 = vector.shape_cast %19 : vector<1x128x128xbf16> to vector<128x128xbf16>
    %cst_15 = arith.constant dense<0.000000e+00> : vector<16x128xf32>
    %21 = tpu.matmul %18, %20, %cst_15 {dimension_numbers = #tpu.dot_dimension_numbers<[1], [0], [0], [1], [0, 0, 1, 1], [], []>} : vector<16x128xbf16>, vector<128x128xbf16>, vector<16x128xf32> -> vector<16x128xf32>
    %c2 = arith.constant 2 : index
    %c0_16 = arith.constant 0 : index
    %22 = vector.load %arg4[%c2, %c0_16] : memref<4x128xf32, #tpu.memory_space<vmem>>, vector<1x128xf32>
    %23 = vector.broadcast %22 : vector<1x128xf32> to vector<16x128xf32>
    %24 = arith.addf %21, %23 : vector<16x128xf32>
    %cst_17 = arith.constant 0.000000e+00 : f32
    %25 = vector.broadcast %cst_17 : f32 to vector<16x128xf32>
    %26 = arith.maximumf %24, %25 : vector<16x128xf32>
    %27 = arith.truncf %26 : vector<16x128xf32> to vector<16x128xbf16>
    %c2_18 = arith.constant 2 : index
    %c0_19 = arith.constant 0 : index
    %c0_20 = arith.constant 0 : index
    %28 = vector.load %arg3[%c2_18, %c0_19, %c0_20] : memref<3x128x128xbf16, #tpu.memory_space<vmem>>, vector<1x128x128xbf16>
    %29 = vector.shape_cast %28 : vector<1x128x128xbf16> to vector<128x128xbf16>
    %cst_21 = arith.constant dense<0.000000e+00> : vector<16x128xf32>
    %30 = tpu.matmul %27, %29, %cst_21 {dimension_numbers = #tpu.dot_dimension_numbers<[1], [0], [0], [1], [0, 0, 1, 1], [], []>} : vector<16x128xbf16>, vector<128x128xbf16>, vector<16x128xf32> -> vector<16x128xf32>
    %c3 = arith.constant 3 : index
    %c0_22 = arith.constant 0 : index
    %31 = vector.load %arg4[%c3, %c0_22] : memref<4x128xf32, #tpu.memory_space<vmem>>, vector<1x128xf32>
    %32 = vector.broadcast %31 : vector<1x128xf32> to vector<16x128xf32>
    %33 = arith.addf %30, %32 : vector<16x128xf32>
    %34 = arith.truncf %33 : vector<16x128xf32> to vector<16x128xbf16>
    %c0_23 = arith.constant 0 : index
    %c0_24 = arith.constant 0 : index
    %35 = vector.load %arg5[%c0_23, %c0_24] : memref<16x128xbf16, #tpu.memory_space<vmem>>, vector<16x128xbf16>
    tpu.vector_store %arg5[%c0_23, %c0_24], %34 {strides = array<i32>} : memref<16x128xbf16, #tpu.memory_space<vmem>>, vector<16x128xbf16>,
    return
  }
  func.func @transform_0(%arg0: i32) -> (i32, i32) {
    %c0_i32 = arith.constant 0 : i32
    %c0_i32_0 = arith.constant 0 : i32
    return %arg0, %c0_i32 : i32, i32
  }
  func.func @transform_1(%arg0: i32) -> (i32, i32) {
    %c0_i32 = arith.constant 0 : i32
    %c0_i32_0 = arith.constant 0 : i32
    %c0_i32_1 = arith.constant 0 : i32
    return %c0_i32, %c0_i32_0 : i32, i32
  }
  func.func @transform_2(%arg0: i32) -> (i32, i32, i32) {
    %c0_i32 = arith.constant 0 : i32
    %c0_i32_0 = arith.constant 0 : i32
    %c0_i32_1 = arith.constant 0 : i32
    %c0_i32_2 = arith.constant 0 : i32
    return %c0_i32, %c0_i32_0, %c0_i32_1 : i32, i32, i32
  }
  func.func @transform_3(%arg0: i32) -> (i32, i32) {
    %c0_i32 = arith.constant 0 : i32
    %c0_i32_0 = arith.constant 0 : i32
    %c0_i32_1 = arith.constant 0 : i32
    return %c0_i32, %c0_i32_0 : i32, i32
  }
  func.func @transform_4(%arg0: i32) -> (i32, i32) {
    %c0_i32 = arith.constant 0 : i32
    %c0_i32_0 = arith.constant 0 : i32
    return %arg0, %c0_i32 : i32, i32
  }
}

</mosaic_0001>

<llo_original>
// kernel: tpu_custom_call.1
$region0: #{tpu_custom_call.1}
  #allocation0 [shape = 'u32[]', space=smem, size = 0x4, offset = 0x4, fixed_abs, tag = 'smem constant byte address 0x4 - core index']
  #allocation1 [shape = 'u32[144,128]{1,0:T(1,128)}', space=vmem, size = 0x12000, scoped, tag = 'internal scratch']
  %s0 = inlined_call_operand.hbm [shape: f32[16,32], index: 0, kind: input, shape index: {}]
  %s1 = inlined_call_operand.hbm [shape: bf16[32,128], index: 1, kind: input, shape index: {}]
  %s2 = inlined_call_operand.hbm [shape: bf16[3,128,128], index: 2, kind: input, shape index: {}]
  %s3 = inlined_call_operand.vmem [shape: f32[4,128], index: 3, kind: input, shape index: {}]
  %s4 = inlined_call_operand.hbm [shape: bf16[16,128], index: 4, kind: output, shape index: {}]
  %s5 = sld [smem:[#allocation0]]
  $region38: #{tpu_custom_call.1} parent=0
    _
  %s7 = ssub.s32 1, %s5
  %s8 = scalar_select 0, %s7, %s5
  $region1: #{tpu_custom_call.1} parent=0
    #allocation2 [shape = 'u8[8192]{0}', space=vmem, size = 0x2000, scoped, tag = 'input window, operand 0, single buffered']
    #allocation3 [shape = 's32[1]{0}', space=sflag, size = 0x4, scoped, tag = 'scoped memory for tpu_custom_call.1']
    #allocation4 [shape = 's32[1]{0}', space=sflag, size = 0x4, scoped, tag = 'scoped memory for tpu_custom_call.1']
    #allocation5 [shape = 'u8[8192]{0}', space=vmem, size = 0x2000, scoped, tag = 'input window, operand 1, single buffered']
    #allocation6 [shape = 's32[1]{0}', space=sflag, size = 0x4, scoped, tag = 'scoped memory for tpu_custom_call.1']
    #allocation7 [shape = 'u8[98304]{0}', space=vmem, size = 0x18000, scoped, tag = 'input window, operand 2, single buffered']
    #allocation8 [shape = 'u8[4096]{0}', space=vmem, size = 0x1000, scoped, tag = 'output window, operand 0, single buffered']
    %9 = vsyncpa [#allocation3], 0
    %10 = vsyncpa [#allocation6], 0
    %11 = vsyncpa [#allocation4], 0
    // Predicated region
    $region2: #{tpu_custom_call.1} parent=1 // pred_check
      _
    $region3: #{tpu_custom_call.1} parent=1 // pred_check_branch
      %13 = sbr.rel (0) target = $region5
    $region4: #{tpu_custom_call.1} parent=1 // pred_region
      %s15 = ssub.s32 256, 256
      %16 = vsyncadd [#allocation3], %s15
      %s17 = sshll.u32 [#allocation2], 4
      %s18 = int_to_ptr.vmem [resolvable:$true] %s17
      %23 = dma.hbm_to_vmem [thread:$0]  %s0, 256, %s18, [#allocation3], 128, 128, 8
    $region5: #{tpu_custom_call.1} parent=1 // pred_fallthru
      _
    // Predicated region
    $region6: #{tpu_custom_call.1} parent=1 // pred_check
      _
    $region7: #{tpu_custom_call.1} parent=1 // pred_check_branch
      %25 = sbr.rel (0) target = $region9
    $region8: #{tpu_custom_call.1} parent=1 // pred_region
      %s27 = ssub.s32 256, 256
      %28 = vsyncadd [#allocation6], %s27
      %s29 = sshll.u32 [#allocation5], 4
      %s30 = int_to_ptr.vmem [resolvable:$true] %s29
      %35 = dma.hbm_to_vmem [thread:$0]  %s1, 256, %s30, [#allocation6], 64, 64, 4
    $region9: #{tpu_custom_call.1} parent=1 // pred_fallthru
      _
    // Predicated region
    $region10: #{tpu_custom_call.1} parent=1 // pred_check
      _
    $region11: #{tpu_custom_call.1} parent=1 // pred_check_branch
      %37 = sbr.rel (0) target = $region13
    $region12: #{tpu_custom_call.1} parent=1 // pred_region
      %s39 = ssub.s32 3072, 3072
      %40 = vsyncadd [#allocation6], %s39
      %s41 = sshll.u32 [#allocation7], 4
      %s42 = int_to_ptr.vmem [resolvable:$true] %s41
      %47 = dma.hbm_to_vmem [thread:$0]  %s2, 3072, %s42, [#allocation6], 64, 64, 4
    $region13: #{tpu_custom_call.1} parent=1 // pred_fallthru
      _
    // Predicated region
    $region14: #{tpu_custom_call.1} parent=1 // pred_check
      _
    $region15: #{tpu_custom_call.1} parent=1 // pred_check_branch
      %49 = sbr.rel (0) target = $region17
    $region16: #{tpu_custom_call.1} parent=1 // pred_region
      _
    $region17: #{tpu_custom_call.1} parent=1 // pred_fallthru
      _
    // Predicated region
    $region18: #{tpu_custom_call.1} parent=1 // pred_check
      _
    $region19: #{tpu_custom_call.1} parent=1 // pred_check_branch
      %51 = sbr.rel (0) target = $region21
    $region20: #{tpu_custom_call.1} parent=1 // pred_region
      %52 = dma.done [#allocation3], 256
    $region21: #{tpu_custom_call.1} parent=1 // pred_fallthru
      _
    // Predicated region
    $region22: #{tpu_custom_call.1} parent=1 // pred_check
      _
    $region23: #{tpu_custom_call.1} parent=1 // pred_check_branch
      %54 = sbr.rel (0) target = $region25
    $region24: #{tpu_custom_call.1} parent=1 // pred_region
      %55 = dma.done [#allocation6], 256
    $region25: #{tpu_custom_call.1} parent=1 // pred_fallthru
      _
    // Predicated region
    $region26: #{tpu_custom_call.1} parent=1 // pred_check
      _
    $region27: #{tpu_custom_call.1} parent=1 // pred_check_branch
      %57 = sbr.rel (0) target = $region29
    $region28: #{tpu_custom_call.1} parent=1 // pred_region
      %58 = dma.done [#allocation6], 3072
    $region29: #{tpu_custom_call.1} parent=1 // pred_fallthru
      _
    %v60 = vld [vmem:[#allocation2] sm:$0xff]
    %v61 = vld [vmem:[#allocation2 + $0x8] sm:$0xff]
    %v62 = vpack.c.bf16 %v61, %v60
    %v63 = vld [vmem:[#allocation5] sm:$0xf]
    %v64 = vld [vmem:[#allocation5 + $0x4] sm:$0xf]
    %v65 = vld [vmem:[#allocation5 + $0x8] sm:$0xf]
    %v66 = vld [vmem:[#allocation5 + $0xc] sm:$0xf]
    %v67 = vld [vmem:[%s3] sm:$0x1]
    %v68 = vlaneseq
    %v69 = vshrl.u32 %v68, 7
    %v70 = vsub.s32 0, %v69
    %v71 = vrot.slane %v67, %v70
    %v76 = vunpack.c.l.b16 %v63
    %v77 = vunpack.c.l.b16 %v64
    %v78 = vunpack.c.l.b16 %v65
    %v79 = vunpack.c.l.b16 %v66
    %v80 = vpack.c.b16 %v77, %v76
    %v81 = vpack.c.b16 %v79, %v78
    %vm84 = vcmask 261120
    %v86 = vsel %vm84, %v62, 0
    %88 = vmatprep.subr.bf16.mxu0 0
    %89 = vmatpush1.bf16.msra.mxu0 0
    %90 = vmatprep.subr.bf16.mxu0 0
    %91 = vmatpush1.bf16.msra.mxu0 0
    %92 = vmatprep.subr.bf16.mxu0 0
    %93 = vmatpush1.bf16.msra.mxu0 0
    %94 = vmatprep.subr.bf16.mxu0 0
    %95 = vmatpush1.bf16.msra.mxu0 0
    %96 = vmatprep.subr.bf16.mxu0 0
    %97 = vmatpush1.bf16.msra.mxu0 0
    %98 = vmatprep.subr.bf16.mxu0 0
    %99 = vmatpush1.bf16.msra.mxu0 0
    %100 = vmatprep.subr.bf16.mxu0 0
    %101 = vmatpush1.bf16.msra.mxu0 %v81
    %102 = vmatprep.subr.bf16.mxu0 0
    %103 = vmatpush1.bf16.msra.mxu0 %v80
    %104 = vmatprep.subr.bf16.mxu0 0
    %105 = vmatpush2.bf16.msra.mxu0 0
    %106 = vmatprep.subr.bf16.mxu0 0
    %107 = vmatpush2.bf16.msra.mxu0 0
    %108 = vmatprep.subr.bf16.mxu0 0
    %109 = vmatpush2.bf16.msra.mxu0 0
    %110 = vmatprep.subr.bf16.mxu0 0
    %111 = vmatpush2.bf16.msra.mxu0 0
    %112 = vmatprep.subr.bf16.mxu0 0
    %113 = vmatpush2.bf16.msra.mxu0 0
    %114 = vmatprep.subr.bf16.mxu0 0
    %115 = vmatpush2.bf16.msra.mxu0 0
    %116 = vmatprep.subr.bf16.mxu0 0
    %117 = vmatpush2.bf16.msra.mxu0 0
    %118 = vmatprep.subr.bf16.mxu0 0
    %119 = vmatpush2.bf16.msra.mxu0 0
    %120 = vmatprep.mubr.bf16.mxu0 0
    %121 = vmatmul.mubr.bf16.gmra.mxu0 %v86
    %v122 = vpop.f32.mrf.mxu0
    %v123 = vadd.f32 %v71, %v122
    %v124 = vpop.f32.mrf.mxu0
    %v125 = vpop.f32.mrf.mxu0
    %v126 = vadd.f32 %v71, %v125
    %v127 = vpop.f32.mrf.mxu0
    %128 = vdwg.mxu0
    %v129 = vmax.f32 %v123, 0.0
    %v130 = vmax.f32 %v126, 0.0
    %v131 = vpack.c.bf16 %v130, %v129
    %v132 = vld [vmem:[#allocation7] sm:$0xf]
    %v133 = vld [vmem:[#allocation7 + $0x4] sm:$0xf]
    %v134 = vld [vmem:[#allocation7 + $0x8] sm:$0xf]
    %v135 = vld [vmem:[#allocation7 + $0xc] sm:$0xf]
    %v136 = vld [vmem:[#allocation7 + $0x10] sm:$0xf]
    %v137 = vld [vmem:[#allocation7 + $0x14] sm:$0xf]
    %v138 = vld [vmem:[#allocation7 + $0x18] sm:$0xf]
    %v139 = vld [vmem:[#allocation7 + $0x1c] sm:$0xf]
    %v140 = vld [vmem:[#allocation7 + $0x20] sm:$0xf]
    %v141 = vld [vmem:[#allocation7 + $0x24] sm:$0xf]
    %v142 = vld [vmem:[#allocation7 + $0x28] sm:$0xf]
    %v143 = vld [vmem:[#allocation7 + $0x2c] sm:$0xf]
    %v144 = vld [vmem:[#allocation7 + $0x30] sm:$0xf]
    %v145 = vld [vmem:[#allocation7 + $0x34] sm:$0xf]
    %v146 = vld [vmem:[#allocation7 + $0x38] sm:$0xf]
    %v147 = vld [vmem:[#allocation7 + $0x3c] sm:$0xf]
    %v148 = vld [vmem:[%s3 + $0x1] sm:$0x1]
    %v149 = vlaneseq
    %v150 = vshrl.u32 %v149, 7
    %v151 = vsub.s32 0, %v150
    %v152 = vrot.slane %v148, %v151
    %v169 = vunpack.c.l.b16 %v132
    %v170 = vunpack.c.l.b16 %v133
    %v171 = vunpack.c.l.b16 %v134
    %v172 = vunpack.c.l.b16 %v135
    %v173 = vunpack.c.l.b16 %v136
    %v174 = vunpack.c.l.b16 %v137
    %v175 = vunpack.c.l.b16 %v138
    %v176 = vunpack.c.l.b16 %v139
    %v177 = vunpack.c.l.b16 %v140
    %v178 = vunpack.c.l.b16 %v141
    %v179 = vunpack.c.l.b16 %v142
    %v180 = vunpack.c.l.b16 %v143
    %v181 = vunpack.c.l.b16 %v144
    %v182 = vunpack.c.l.b16 %v145
    %v183 = vunpack.c.l.b16 %v146
    %v184 = vunpack.c.l.b16 %v147
    %v185 = vpack.c.b16 %v170, %v169
    %v186 = vpack.c.b16 %v172, %v171
    %v187 = vpack.c.b16 %v174, %v173
    %v188 = vpack.c.b16 %v176, %v175
    %v189 = vpack.c.b16 %v178, %v177
    %v190 = vpack.c.b16 %v180, %v179
    %v191 = vpack.c.b16 %v182, %v181
    %v192 = vpack.c.b16 %v184, %v183
    %201 = vmatprep.subr.bf16.mxu0 0
    %202 = vmatpush1.bf16.msra.mxu0 %v192
    %203 = vmatprep.subr.bf16.mxu0 0
    %204 = vmatpush1.bf16.msra.mxu0 %v191
    %205 = vmatprep.subr.bf16.mxu0 0
    %206 = vmatpush1.bf16.msra.mxu0 %v190
    %207 = vmatprep.subr.bf16.mxu0 0
    %208 = vmatpush1.bf16.msra.mxu0 %v189
    %209 = vmatprep.subr.bf16.mxu0 0
    %210 = vmatpush1.bf16.msra.mxu0 %v188
    %211 = vmatprep.subr.bf16.mxu0 0
    %212 = vmatpush1.bf16.msra.mxu0 %v187
    %213 = vmatprep.subr.bf16.mxu0 0
    %214 = vmatpush1.bf16.msra.mxu0 %v186
    %215 = vmatprep.subr.bf16.mxu0 0
    %216 = vmatpush1.bf16.msra.mxu0 %v185
    %217 = vmatprep.subr.bf16.mxu0 0
    %218 = vmatpush2.bf16.msra.mxu0 0
    %219 = vmatprep.subr.bf16.mxu0 0
    %220 = vmatpush2.bf16.msra.mxu0 0
    %221 = vmatprep.subr.bf16.mxu0 0
    %222 = vmatpush2.bf16.msra.mxu0 0
    %223 = vmatprep.subr.bf16.mxu0 0
    %224 = vmatpush2.bf16.msra.mxu0 0
    %225 = vmatprep.subr.bf16.mxu0 0
    %226 = vmatpush2.bf16.msra.mxu0 0
    %227 = vmatprep.subr.bf16.mxu0 0
    %228 = vmatpush2.bf16.msra.mxu0 0
    %229 = vmatprep.subr.bf16.mxu0 0
    %230 = vmatpush2.bf16.msra.mxu0 0
    %231 = vmatprep.subr.bf16.mxu0 0
    %232 = vmatpush2.bf16.msra.mxu0 0
    %233 = vmatprep.mubr.bf16.mxu0 0
    %234 = vmatmul.mubr.bf16.gmra.mxu0 %v131
    %v235 = vpop.f32.mrf.mxu0
    %v236 = vadd.f32 %v152, %v235
    %v237 = vpop.f32.mrf.mxu0
    %v238 = vpop.f32.mrf.mxu0
    %v239 = vadd.f32 %v152, %v238
    %v240 = vpop.f32.mrf.mxu0
    %241 = vdwg.mxu0
    %v242 = vmax.f32 %v236, 0.0
    %v243 = vmax.f32 %v239, 0.0
    %v244 = vpack.c.bf16 %v243, %v242
    %s245 = scalar_lea.vmem [#allocation7], 64
    %v246 = vld [vmem:[%s245] sm:$0xf]
    %v247 = vld [vmem:[%s245 + $0x4] sm:$0xf]
    %v248 = vld [vmem:[%s245 + $0x8] sm:$0xf]
    %v249 = vld [vmem:[%s245 + $0xc] sm:$0xf]
    %v250 = vld [vmem:[%s245 + $0x10] sm:$0xf]
    %v251 = vld [vmem:[%s245 + $0x14] sm:$0xf]
    %v252 = vld [vmem:[%s245 + $0x18] sm:$0xf]
    %v253 = vld [vmem:[%s245 + $0x1c] sm:$0xf]
    %v254 = vld [vmem:[%s245 + $0x20] sm:$0xf]
    %v255 = vld [vmem:[%s245 + $0x24] sm:$0xf]
    %v256 = vld [vmem:[%s245 + $0x28] sm:$0xf]
    %v257 = vld [vmem:[%s245 + $0x2c] sm:$0xf]
    %v258 = vld [vmem:[%s245 + $0x30] sm:$0xf]
    %v259 = vld [vmem:[%s245 + $0x34] sm:$0xf]
    %v260 = vld [vmem:[%s245 + $0x38] sm:$0xf]
    %v261 = vld [vmem:[%s245 + $0x3c] sm:$0xf]
    %v262 = vld [vmem:[%s3 + $0x2] sm:$0x1]
    %v263 = vlaneseq
    %v264 = vshrl.u32 %v263, 7
    %v265 = vsub.s32 0, %v264
    %v266 = vrot.slane %v262, %v265
    %v283 = vunpack.c.l.b16 %v246
    %v284 = vunpack.c.l.b16 %v247
    %v285 = vunpack.c.l.b16 %v248
    %v286 = vunpack.c.l.b16 %v249
    %v287 = vunpack.c.l.b16 %v250
    %v288 = vunpack.c.l.b16 %v251
    %v289 = vunpack.c.l.b16 %v252
    %v290 = vunpack.c.l.b16 %v253
    %v291 = vunpack.c.l.b16 %v254
    %v292 = vunpack.c.l.b16 %v255
    %v293 = vunpack.c.l.b16 %v256
    %v294 = vunpack.c.l.b16 %v257
    %v295 = vunpack.c.l.b16 %v258
    %v296 = vunpack.c.l.b16 %v259
    %v297 = vunpack.c.l.b16 %v260
    %v298 = vunpack.c.l.b16 %v261
    %v299 = vpack.c.b16 %v284, %v283
    %v300 = vpack.c.b16 %v286, %v285
    %v301 = vpack.c.b16 %v288, %v287
    %v302 = vpack.c.b16 %v290, %v289
    %v303 = vpack.c.b16 %v292, %v291
    %v304 = vpack.c.b16 %v294, %v293
    %v305 = vpack.c.b16 %v296, %v295
    %v306 = vpack.c.b16 %v298, %v297
    %315 = vmatprep.subr.bf16.mxu0 0
    %316 = vmatpush1.bf16.msra.mxu0 %v306
    %317 = vmatprep.subr.bf16.mxu0 0
    %318 = vmatpush1.bf16.msra.mxu0 %v305
    %319 = vmatprep.subr.bf16.mxu0 0
    %320 = vmatpush1.bf16.msra.mxu0 %v304
    %321 = vmatprep.subr.bf16.mxu0 0
    %322 = vmatpush1.bf16.msra.mxu0 %v303
    %323 = vmatprep.subr.bf16.mxu0 0
    %324 = vmatpush1.bf16.msra.mxu0 %v302
    %325 = vmatprep.subr.bf16.mxu0 0
    %326 = vmatpush1.bf16.msra.mxu0 %v301
    %327 = vmatprep.subr.bf16.mxu0 0
    %328 = vmatpush1.bf16.msra.mxu0 %v300
    %329 = vmatprep.subr.bf16.mxu0 0
    %330 = vmatpush1.bf16.msra.mxu0 %v299
    %331 = vmatprep.subr.bf16.mxu0 0
    %332 = vmatpush2.bf16.msra.mxu0 0
    %333 = vmatprep.subr.bf16.mxu0 0
    %334 = vmatpush2.bf16.msra.mxu0 0
    %335 = vmatprep.subr.bf16.mxu0 0
    %336 = vmatpush2.bf16.msra.mxu0 0
    %337 = vmatprep.subr.bf16.mxu0 0
    %338 = vmatpush2.bf16.msra.mxu0 0
    %339 = vmatprep.subr.bf16.mxu0 0
    %340 = vmatpush2.bf16.msra.mxu0 0
    %341 = vmatprep.subr.bf16.mxu0 0
    %342 = vmatpush2.bf16.msra.mxu0 0
    %343 = vmatprep.subr.bf16.mxu0 0
    %344 = vmatpush2.bf16.msra.mxu0 0
    %345 = vmatprep.subr.bf16.mxu0 0
    %346 = vmatpush2.bf16.msra.mxu0 0
    %347 = vmatprep.mubr.bf16.mxu0 0
    %348 = vmatmul.mubr.bf16.gmra.mxu0 %v244
    %v349 = vpop.f32.mrf.mxu0
    %v350 = vadd.f32 %v266, %v349
    %v351 = vpop.f32.mrf.mxu0
    %v352 = vpop.f32.mrf.mxu0
    %v353 = vadd.f32 %v266, %v352
    %v354 = vpop.f32.mrf.mxu0
    %355 = vdwg.mxu0
    %v356 = vmax.f32 %v350, 0.0
    %v357 = vmax.f32 %v353, 0.0
    %v358 = vpack.c.bf16 %v357, %v356
    %s359 = scalar_lea.vmem [#allocation7], 128
    %v360 = vld [vmem:[%s359] sm:$0xf]
    %v361 = vld [vmem:[%s359 + $0x4] sm:$0xf]
    %v362 = vld [vmem:[%s359 + $0x8] sm:$0xf]
    %v363 = vld [vmem:[%s359 + $0xc] sm:$0xf]
    %v364 = vld [vmem:[%s359 + $0x10] sm:$0xf]
    %v365 = vld [vmem:[%s359 + $0x14] sm:$0xf]
    %v366 = vld [vmem:[%s359 + $0x18] sm:$0xf]
    %v367 = vld [vmem:[%s359 + $0x1c] sm:$0xf]
    %v368 = vld [vmem:[%s359 + $0x20] sm:$0xf]
    %v369 = vld [vmem:[%s359 + $0x24] sm:$0xf]
    %v370 = vld [vmem:[%s359 + $0x28] sm:$0xf]
    %v371 = vld [vmem:[%s359 + $0x2c] sm:$0xf]
    %v372 = vld [vmem:[%s359 + $0x30] sm:$0xf]
    %v373 = vld [vmem:[%s359 + $0x34] sm:$0xf]
    %v374 = vld [vmem:[%s359 + $0x38] sm:$0xf]
    %v375 = vld [vmem:[%s359 + $0x3c] sm:$0xf]
    %v376 = vld [vmem:[%s3 + $0x3] sm:$0x1]
    %v377 = vlaneseq
    %v378 = vshrl.u32 %v377, 7
    %v379 = vsub.s32 0, %v378
    %v380 = vrot.slane %v376, %v379
    %v397 = vunpack.c.l.b16 %v360
    %v398 = vunpack.c.l.b16 %v361
    %v399 = vunpack.c.l.b16 %v362
    %v400 = vunpack.c.l.b16 %v363
    %v401 = vunpack.c.l.b16 %v364
    %v402 = vunpack.c.l.b16 %v365
    %v403 = vunpack.c.l.b16 %v366
    %v404 = vunpack.c.l.b16 %v367
    %v405 = vunpack.c.l.b16 %v368
    %v406 = vunpack.c.l.b16 %v369
    %v407 = vunpack.c.l.b16 %v370
    %v408 = vunpack.c.l.b16 %v371
    %v409 = vunpack.c.l.b16 %v372
    %v410 = vunpack.c.l.b16 %v373
    %v411 = vunpack.c.l.b16 %v374
    %v412 = vunpack.c.l.b16 %v375
    %v413 = vpack.c.b16 %v398, %v397
    %v414 = vpack.c.b16 %v400, %v399
    %v415 = vpack.c.b16 %v402, %v401
    %v416 = vpack.c.b16 %v404, %v403
    %v417 = vpack.c.b16 %v406, %v405
    %v418 = vpack.c.b16 %v408, %v407
    %v419 = vpack.c.b16 %v410, %v409
    %v420 = vpack.c.b16 %v412, %v411
    %429 = vmatprep.subr.bf16.mxu0 0
    %430 = vmatpush1.bf16.msra.mxu0 %v420
    %431 = vmatprep.subr.bf16.mxu0 0
    %432 = vmatpush1.bf16.msra.mxu0 %v419
    %433 = vmatprep.subr.bf16.mxu0 0
    %434 = vmatpush1.bf16.msra.mxu0 %v418
    %435 = vmatprep.subr.bf16.mxu0 0
    %436 = vmatpush1.bf16.msra.mxu0 %v417
    %437 = vmatprep.subr.bf16.mxu0 0
    %438 = vmatpush1.bf16.msra.mxu0 %v416
    %439 = vmatprep.subr.bf16.mxu0 0
    %440 = vmatpush1.bf16.msra.mxu0 %v415
    %441 = vmatprep.subr.bf16.mxu0 0
    %442 = vmatpush1.bf16.msra.mxu0 %v414
    %443 = vmatprep.subr.bf16.mxu0 0
    %444 = vmatpush1.bf16.msra.mxu0 %v413
    %445 = vmatprep.subr.bf16.mxu0 0
    %446 = vmatpush2.bf16.msra.mxu0 0
    %447 = vmatprep.subr.bf16.mxu0 0
    %448 = vmatpush2.bf16.msra.mxu0 0
    %449 = vmatprep.subr.bf16.mxu0 0
    %450 = vmatpush2.bf16.msra.mxu0 0
    %451 = vmatprep.subr.bf16.mxu0 0
    %452 = vmatpush2.bf16.msra.mxu0 0
    %453 = vmatprep.subr.bf16.mxu0 0
    %454 = vmatpush2.bf16.msra.mxu0 0
    %455 = vmatprep.subr.bf16.mxu0 0
    %456 = vmatpush2.bf16.msra.mxu0 0
    %457 = vmatprep.subr.bf16.mxu0 0
    %458 = vmatpush2.bf16.msra.mxu0 0
    %459 = vmatprep.subr.bf16.mxu0 0
    %460 = vmatpush2.bf16.msra.mxu0 0
    %461 = vmatprep.mubr.bf16.mxu0 0
    %462 = vmatmul.mubr.bf16.gmra.mxu0 %v358
    %v463 = vpop.f32.mrf.mxu0
    %v464 = vadd.f32 %v380, %v463
    %v465 = vpop.f32.mrf.mxu0
    %v466 = vpop.f32.mrf.mxu0
    %v467 = vadd.f32 %v380, %v466
    %v468 = vpop.f32.mrf.mxu0
    %469 = vdwg.mxu0
    %v470 = vpack.c.bf16 %v467, %v464
    %v472 = vunpack.c.l.b16 %v470
    %v473 = vunpack.c.h.b16 %v470
    %v474 = vpack.c.b16 %v472, %v472
    %v475 = vpack.c.b16 %v473, %v473
    %478 = vst [vmem:[#allocation8] sm:$0xf] %v474
    %479 = vst [vmem:[#allocation8 + $0x4] sm:$0xf] %v475
    // Predicated region
    $region30: #{tpu_custom_call.1} parent=1 // pred_check
      _
    $region31: #{tpu_custom_call.1} parent=1 // pred_check_branch
      %481 = sbr.rel (0) target = $region33
    $region32: #{tpu_custom_call.1} parent=1 // pred_region
      %s483 = ssub.s32 128, 128
      %484 = vsyncadd [#allocation4], %s483
      %s485 = sshll.u32 [#allocation8], 4
      %s486 = int_to_ptr.vmem [resolvable:$true] %s485
      %491 = dma.vmem_to_hbm [thread:$0]  %s486, 128, %s4, [#allocation4], 64, 64, 4
    $region33: #{tpu_custom_call.1} parent=1 // pred_fallthru
      _
    // Predicated region
    $region34: #{tpu_custom_call.1} parent=1 // pred_check
      _
    $region35: #{tpu_custom_call.1} parent=1 // pred_check_branch
      %493 = sbr.rel (0) target = $region37
    $region36: #{tpu_custom_call.1} parent=1 // pred_region
      %494 = dma.done [#allocation4], 128
    $region37: #{tpu_custom_call.1} parent=1 // pred_fallthru
      _
    %495 = vsyncpa [#allocation3], 1
    %496 = vsyncpa [#allocation6], 1
    %497 = vsyncpa [#allocation4], 1

</llo_original>
